<compile_context>
chip_gen: v7x
topology: tpu7x:2x2x1
jax: 0.10.0
libtpu: 0.0.40
codegen_flags: <defaults>
</compile_context>

<pallas_src>
import math
import functools

import jax
import jax.numpy as jnp
from jax import lax
from jax.experimental import pallas as pl
from jax.experimental.pallas import tpu as pltpu

EPS = 1e-12
_NEG_MASK = -100000.0
_TRANS_B = (((1,), (1,)), ((), ()))  # contract last dim of both operands: Q @ K^T without .T
_MATMUL_WEIGHTS = ("wq", "wk", "wv", "wd", "w1", "w2")


def _layer_norm_f32(x, gamma, beta, eps):
    mu = jnp.mean(x, axis=-1, keepdims=True)
    var = jnp.mean((x - mu) ** 2, axis=-1, keepdims=True)
    return (x - mu) * lax.rsqrt(var + eps) * gamma + beta


def _cast_weights(params, weight_dtype):
    """Optionally store the big matmul weights in bf16 (f32 accumulation stays)."""
    if weight_dtype is None:
        return dict(params)
    out = dict(params)
    for name in _MATMUL_WEIGHTS:
        out[name] = params[name].astype(weight_dtype)
    return out


# ----------------------------------------------------------------------------
# Kernel 1 (single step, fused):  biased = LayerNorm(tgt + segment_bias)
#                                 k = biased @ Wk + bk ;  v = biased @ Wv + bv
# Loop-invariant (shared layer weights + identity segment transformers), so it runs ONCE.
# ----------------------------------------------------------------------------
def prepare_kv_kernel(tgt_ref, segb_ref, gc_ref, bc_ref,
                      wk_ref, bk_ref, wv_ref, bv_ref,
                      k_ref, v_ref, *, eps):
    x = tgt_ref[...].astype(jnp.float32) + segb_ref[...].astype(jnp.float32)   # [B*Lk, E]
    biased = _layer_norm_f32(x, gc_ref[...].astype(jnp.float32),
                             bc_ref[...].astype(jnp.float32), eps)
    wdt = wk_ref.dtype
    bz = biased.astype(wdt)
    k = jnp.dot(bz, wk_ref[...], preferred_element_type=jnp.float32) \
        + bk_ref[...].astype(jnp.float32)
    v = jnp.dot(bz, wv_ref[...], preferred_element_type=jnp.float32) \
        + bv_ref[...].astype(jnp.float32)
    k_ref[...] = k.astype(k_ref.dtype)
    v_ref[...] = v.astype(v_ref.dtype)


def prepare_kv(tgt_features, segment_bias, params, *, eps=EPS):
    B, Lk, E = tgt_features.shape
    tgt2 = tgt_features.reshape(B * Lk, E)
    segb2 = segment_bias.reshape(B * Lk, E)
    vmem = pl.BlockSpec(memory_space=pltpu.MemorySpace.VMEM)
    k2, v2 = pl.pallas_call(
        functools.partial(prepare_kv_kernel, eps=eps),
        out_shape=(jax.ShapeDtypeStruct((B * Lk, E), jnp.float32),
                   jax.ShapeDtypeStruct((B * Lk, E), jnp.float32)),
        in_specs=[vmem] * 8,
        out_specs=(vmem, vmem),
    )(tgt2, segb2, params["gc"], params["bc"],
      params["wk"], params["bk"], params["wv"], params["bv"])
    return k2, v2


# ----------------------------------------------------------------------------
# Kernel 2: EncodingLayer (cross-attention with precomputed K/V + dense + LN + FFN + LN).
#           Processes `rows` batch rows per grid step; all linears run on the flattened
#           [rows*L, E] slab for good MXU fill; head outputs merged as values (lane-dense).
# ----------------------------------------------------------------------------
def encoding_layer_kernel(x_ref, k_ref, v_ref, mask_ref,
                          wq_ref, bq_ref, wd_ref, bd_ref,
                          g1_ref, be1_ref, w1_ref, bb1_ref,
                          w2_ref, bb2_ref, g2_ref, be2_ref,
                          out_ref, *, num_heads, rows, q_len, kv_len, eps):
    E = x_ref.shape[-1]
    Dh = E // num_heads
    scale = 1.0 / math.sqrt(Dh)
    wdt = wq_ref.dtype

    x = x_ref[...]                          # [rows*Lq, E]
    xf = x.astype(jnp.float32)
    k = k_ref[...].astype(jnp.float32)      # [rows*Lk, E]  precomputed (K proj, f32)
    v = v_ref[...].astype(jnp.float32)      # [rows*Lk, E]  precomputed (V proj, f32)

    # --- query projection (Linear: x @ W + b); f32 accumulation; fold 1/sqrt(Dh) once ---
    q = jnp.dot(x.astype(wdt), wq_ref[...], preferred_element_type=jnp.float32) \
        + bq_ref[...].astype(jnp.float32)
    q = q * scale

    # --- per-head lane slices hoisted OUT of the row loop (H*3 slices per block) ---
    q_h = [q[:, h * Dh:(h + 1) * Dh] for h in range(num_heads)]
    k_h = [k[:, h * Dh:(h + 1) * Dh] for h in range(num_heads)]
    v_h = [v[:, h * Dh:(h + 1) * Dh] for h in range(num_heads)]

    # additive mask bias, computed once per block: [rows, 1, Lk]
    neg_bias = (1.0 - mask_ref[...].astype(jnp.float32)) * _NEG_MASK

    # --- attention: head outputs kept as values and merged lane-dense (no scratch stores) ---
    row_avs = []
    for b in range(rows):
        bias_b = neg_bias[b]                                      # [1, Lk]
        head_outs = []
        for h in range(num_heads):
            qh = q_h[h][b * q_len:(b + 1) * q_len, :]             # 8-aligned sublane slices
            kh = k_h[h][b * kv_len:(b + 1) * kv_len, :]
            vh = v_h[h][b * kv_len:(b + 1) * kv_len, :]
            s = lax.dot_general(qh, kh, _TRANS_B,
                                preferred_element_type=jnp.float32)   # [Lq, Lk]
            s = s + bias_b                                        # implicit broadcast over Lq
            s = s - jnp.max(s, axis=-1, keepdims=True)
            p = jnp.exp(s)
            p = p * pl.reciprocal(jnp.sum(p, axis=-1, keepdims=True), approx=True)
            head_outs.append(jnp.dot(p, vh, preferred_element_type=jnp.float32))  # [Lq, Dh]
        row_avs.append(jnp.concatenate(head_outs, axis=-1))       # [Lq, E] lane-dense
    av = jnp.concatenate(row_avs, axis=0) if rows > 1 else row_avs[0]   # [rows*Lq, E]

    # --- attention output dense + residual + LN ---
    dense = jnp.dot(av.astype(wdt), wd_ref[...], preferred_element_type=jnp.float32) \
        + bd_ref[...].astype(jnp.float32)
    interim = _layer_norm_f32(dense + xf,
                              g1_ref[...].astype(jnp.float32),
                              be1_ref[...].astype(jnp.float32), eps)

    # --- FFN (Linear -> exact GELU -> Linear) + residual + LN ---
    h1 = jnp.dot(interim.astype(wdt), w1_ref[...], preferred_element_type=jnp.float32) \
        + bb1_ref[...].astype(jnp.float32)
    h1 = 0.5 * h1 * (1.0 + lax.erf(h1 * (1.0 / math.sqrt(2.0))))
    ffn = jnp.dot(h1.astype(wdt), w2_ref[...], preferred_element_type=jnp.float32) \
        + bb2_ref[...].astype(jnp.float32)
    out = _layer_norm_f32(ffn + interim,
                          g2_ref[...].astype(jnp.float32),
                          be2_ref[...].astype(jnp.float32), eps)
    out_ref[...] = out.astype(out_ref.dtype)


def _pick_batch_block(B, Lq, Lk, batch_block):
    """Fill the MXU M dimension: take the whole batch unless a 2-way split (v7x 2 TCs)
    still gives >= 256 flattened rows per step."""
    if batch_block is None:
        if B % 2 == 0 and (B // 2) * Lq >= 256:
            batch_block = B // 2
        else:
            batch_block = B
    bblk = batch_block
    if B % bblk != 0:
        bblk = B
    # (8,128) legality of the flattened [bblk*L, E] blocks when not taking the full batch.
    if bblk != B and ((bblk * Lq) % 8 != 0 or (bblk * Lk) % 8 != 0):
        bblk = B
    return bblk


def _vmem_limit_bytes(weights, bblk, Lq, Lk, E, F):
    wbytes = sum(int(w.size) * jnp.dtype(w.dtype).itemsize for w in weights)
    io = 4 * (2 * bblk * Lq * E + 2 * bblk * Lk * E + bblk * Lk)     # x/out + k/v + mask blocks
    interm = 8 * bblk * max(Lq, Lk) * max(E, F) * 4                  # f32 q/av/h1/... temporaries
    # resident weights + double-buffered I/O + temporaries + headroom; stay under v7x's 64 MiB.
    return int(min(wbytes + 2 * io + interm + (8 << 20), 60 << 20))


def encoding_layer(in_features, k2, v2, mask, params, *, num_heads, eps=EPS, batch_block=None):
    B, Lq, E = in_features.shape
    Lk = k2.shape[0] // B
    F = params["w1"].shape[1]
    assert E % num_heads == 0

    bblk = _pick_batch_block(B, Lq, Lk, batch_block)
    grid = (B // bblk,)

    # Flatten batch*seq so the kernel works on lane-dense 2-D slabs (no in-kernel reshapes).
    x2 = in_features.reshape(B * Lq, E)
    mask3 = mask.reshape(B, 1, Lk).astype(jnp.float32)

    weight_names = ["wq", "bq", "wd", "bd", "g1", "be1",
                    "w1", "bb1", "w2", "bb2", "g2", "be2"]
    weights = [params[n] for n in weight_names]
    # Weights/LN params are grid-invariant: keep them whole & resident in VMEM.
    weight_specs = [pl.BlockSpec(memory_space=pltpu.MemorySpace.VMEM) for _ in weights]

    out2 = pl.pallas_call(
        functools.partial(encoding_layer_kernel, num_heads=num_heads,
                          rows=bblk, q_len=Lq, kv_len=Lk, eps=eps),
        out_shape=jax.ShapeDtypeStruct((B * Lq, E), in_features.dtype),
        grid=grid,
        in_specs=[
            pl.BlockSpec((bblk * Lq, E), lambda g: (g, 0)),
            pl.BlockSpec((bblk * Lk, E), lambda g: (g, 0)),
            pl.BlockSpec((bblk * Lk, E), lambda g: (g, 0)),
            pl.BlockSpec((bblk, 1, Lk), lambda g: (g, 0, 0)),
        ] + weight_specs,
        out_specs=pl.BlockSpec((bblk * Lq, E), lambda g: (g, 0)),
        compiler_params=pltpu.CompilerParams(
            dimension_semantics=("parallel",),   # batch axis shards across TCs on v7x
            vmem_limit_bytes=_vmem_limit_bytes(weights, bblk, Lq, Lk, E, F),
        ),
    )(x2, k2, v2, mask3, *weights)
    return out2.reshape(B, Lq, E)


# ----------------------------------------------------------------------------
# CombinerEncoder forward
# ----------------------------------------------------------------------------
def combiner_encoder_forward(in_features, tgt_features, mask, segments, segment_bias,
                             params, *, num_layers, num_heads, eps=EPS,
                             batch_block=None, weight_dtype=None):
    del segments  # unused: external per-segment transformers are identity (see TODO)
    # TODO(synk): the external `transformers` modules passed to __init__ are not defined in the
    # reference; per-segment transformer.layer(i, ...) is treated as identity, so tgt_features
    # never changes. The reference also uses a single shared EncodingLayer + shared norm for all
    # layers, so biased-LayerNorm AND the K/V projections are loop-invariant and hoisted out of
    # the layer loop (computed exactly once).
    p = _cast_weights(params, weight_dtype)
    k2, v2 = prepare_kv(tgt_features, segment_bias, p, eps=eps)
    for _ in range(num_layers):
        in_features = encoding_layer(in_features, k2, v2, mask, p,
                                     num_heads=num_heads, eps=eps, batch_block=batch_block)
    return in_features


# ----------------------------------------------------------------------------
# Pure-JAX reference (mirrors the PyTorch math) for a correctness check.
# ----------------------------------------------------------------------------
def reference_forward(in_features, tgt_features, mask, segment_bias, p,
                      *, num_layers, num_heads, eps=EPS):
    def ln(x, g, b):
        mu = jnp.mean(x, -1, keepdims=True)
        var = jnp.mean((x - mu) ** 2, -1, keepdims=True)
        return (x - mu) / jnp.sqrt(var + eps) * g + b

    B, Lq, E = in_features.shape
    Dh = E // num_heads
    for _ in range(num_layers):
        biased = ln(tgt_features + segment_bias, p["gc"], p["bc"])
        x = in_features
        q = x @ p["wq"] + p["bq"]
        k = biased @ p["wk"] + p["bk"]
        v = biased @ p["wv"] + p["bv"]

        def sep(t):
            Bt, L, _ = t.shape
            return t.reshape(Bt, L, num_heads, Dh).transpose(0, 2, 1, 3)

        qh, kh, vh = sep(q), sep(k), sep(v)
        att = jnp.einsum("bhqd,bhkd->bhqk", qh, kh) / math.sqrt(Dh)
        att = att + (1.0 - mask)[:, None, None, :] * -100000.0
        att = jax.nn.softmax(att, axis=-1)
        av = jnp.einsum("bhqk,bhkd->bhqd", att, vh).transpose(0, 2, 1, 3).reshape(B, Lq, E)
        dense = av @ p["wd"] + p["bd"]
        interim = ln(dense + x, p["g1"], p["be1"])
        h1 = interim @ p["w1"] + p["bb1"]
        h1 = 0.5 * h1 * (1.0 + jax.scipy.special.erf(h1 / math.sqrt(2.0)))
        ffn = h1 @ p["w2"] + p["bb2"]
        in_features = ln(ffn + interim, p["g2"], p["be2"])
    return in_features


if __name__ == "__main__":
    # E=128, F=256 keep lanes dense (no masked partial stores on projections / FFN).
    B, Lq, Lk, E, H, F = 4, 8, 8, 128, 4, 256
    num_layers = 2

    key = jax.random.PRNGKey(0)
    keys = jax.random.split(key, 20)

    def w(k, shape, scale=0.05):
        return jax.random.normal(k, shape, jnp.float32) * scale

    params = {
        "wq": w(keys[0], (E, E)), "bq": w(keys[1], (1, E)),
        "wk": w(keys[2], (E, E)), "bk": w(keys[3], (1, E)),
        "wv": w(keys[4], (E, E)), "bv": w(keys[5], (1, E)),
        "wd": w(keys[6], (E, E)), "bd": w(keys[7], (1, E)),
        "g1": jnp.ones((1, E), jnp.float32), "be1": jnp.zeros((1, E), jnp.float32),
        "w1": w(keys[8], (E, F)), "bb1": w(keys[9], (1, F)),
        "w2": w(keys[10], (F, E)), "bb2": w(keys[11], (1, E)),
        "g2": jnp.ones((1, E), jnp.float32), "be2": jnp.zeros((1, E), jnp.float32),
        "gc": jnp.ones((1, E), jnp.float32), "bc": jnp.zeros((1, E), jnp.float32),
    }

    in_features = jax.random.normal(keys[12], (B, Lq, E), jnp.float32)
    tgt_features = jax.random.normal(keys[13], (B, Lk, E), jnp.float32)
    segment_bias = jax.random.normal(keys[14], (B, Lk, E), jnp.float32) * 0.1
    mask = (jax.random.uniform(keys[15], (B, Lk)) > 0.2).astype(jnp.float32)
    mask = mask.at[:, 0].set(1.0)          # ensure at least one valid key per row
    segments = [3, Lk - 3]                 # accepted but unused (identity transformers)

    ref = reference_forward(in_features, tgt_features, mask, segment_bias, params,
                            num_layers=num_layers, num_heads=H)

    # Default path: full-batch block -> grid=(1,), maximal MXU M fill; f32 weights.
    out = combiner_encoder_forward(in_features, tgt_features, mask, segments, segment_bias,
                                   params, num_layers=num_layers, num_heads=H)
    out = jax.block_until_ready(out)
    assert out.shape == (B, Lq, E)
    # tolerance slightly looser than exact: softmax uses the EUP approximate reciprocal.
    assert jnp.allclose(out, ref, rtol=5e-3, atol=5e-3), "mismatch vs pure-JAX reference (f32)"

    # bf16-weight path (recommended for v6e/v7x at real BERT scale): f32 accumulation,
    # LayerNorm/softmax/biases stay f32; looser tolerance vs the f32 reference.
    out_bf16 = combiner_encoder_forward(in_features, tgt_features, mask, segments, segment_bias,
                                        params, num_layers=num_layers, num_heads=H,
                                        weight_dtype=jnp.bfloat16)
    out_bf16 = jax.block_until_ready(out_bf16)
    assert out_bf16.shape == (B, Lq, E)
    assert bool(jnp.isfinite(out_bf16).all())
    assert float(jnp.max(jnp.abs(out_bf16 - ref))) < 0.25, "bf16 path diverged from reference"

    print("KERNEL_OK")
</pallas_src>

<mosaic_0001>
module attributes {stable_mosaic.version = 11 : i64} {
  func.func @prepare_kv_kernel(%arg0: memref<32x128xf32, #tpu.memory_space<vmem>>, %arg1: memref<32x128xf32, #tpu.memory_space<vmem>>, %arg2: memref<1x128xf32, #tpu.memory_space<vmem>>, %arg3: memref<1x128xf32, #tpu.memory_space<vmem>>, %arg4: memref<128x128xf32, #tpu.memory_space<vmem>>, %arg5: memref<1x128xf32, #tpu.memory_space<vmem>>, %arg6: memref<128x128xf32, #tpu.memory_space<vmem>>, %arg7: memref<1x128xf32, #tpu.memory_space<vmem>>, %arg8: memref<32x128xf32, #tpu.memory_space<vmem>>, %arg9: memref<32x128xf32, #tpu.memory_space<vmem>>) attributes {dimension_semantics = [], scalar_prefetch = 0 : i64, scratch_operands = 0 : i64, tpu.core_type = #tpu.core_type<tc>} {
    %c0 = arith.constant 0 : index
    %c0_0 = arith.constant 0 : index
    %0 = vector.load %arg0[%c0, %c0_0] : memref<32x128xf32, #tpu.memory_space<vmem>>, vector<32x128xf32>
    %c0_1 = arith.constant 0 : index
    %c0_2 = arith.constant 0 : index
    %1 = vector.load %arg1[%c0_1, %c0_2] : memref<32x128xf32, #tpu.memory_space<vmem>>, vector<32x128xf32>
    %2 = arith.addf %0, %1 : vector<32x128xf32>
    %c0_3 = arith.constant 0 : index
    %c0_4 = arith.constant 0 : index
    %3 = vector.load %arg2[%c0_3, %c0_4] : memref<1x128xf32, #tpu.memory_space<vmem>>, vector<1x128xf32>
    %c0_5 = arith.constant 0 : index
    %c0_6 = arith.constant 0 : index
    %4 = vector.load %arg3[%c0_5, %c0_6] : memref<1x128xf32, #tpu.memory_space<vmem>>, vector<1x128xf32>
    %cst = arith.constant dense<0.000000e+00> : vector<32xf32>
    %5 = vector.multi_reduction <add>, %2, %cst [1] : vector<32x128xf32> to vector<32xf32>
    %6 = vector.shape_cast %5 : vector<32xf32> to vector<32x1xf32>
    %cst_7 = arith.constant 1.280000e+02 : f32
    %7 = vector.broadcast %cst_7 : f32 to vector<32x1xf32>
    %8 = arith.divf %6, %7 : vector<32x1xf32>
    %9 = vector.broadcast %8 : vector<32x1xf32> to vector<32x128xf32>
    %10 = arith.subf %2, %9 : vector<32x128xf32>
    %11 = arith.mulf %10, %10 : vector<32x128xf32>
    %cst_8 = arith.constant dense<0.000000e+00> : vector<32xf32>
    %12 = vector.multi_reduction <add>, %11, %cst_8 [1] : vector<32x128xf32> to vector<32xf32>
    %13 = vector.shape_cast %12 : vector<32xf32> to vector<32x1xf32>
    %cst_9 = arith.constant 1.280000e+02 : f32
    %14 = vector.broadcast %cst_9 : f32 to vector<32x1xf32>
    %15 = arith.divf %13, %14 : vector<32x1xf32>
    %16 = vector.broadcast %8 : vector<32x1xf32> to vector<32x128xf32>
    %17 = arith.subf %2, %16 : vector<32x128xf32>
    %cst_10 = arith.constant 9.99999996E-13 : f32
    %18 = vector.broadcast %cst_10 : f32 to vector<32x1xf32>
    %19 = arith.addf %15, %18 : vector<32x1xf32>
    %20 = math.rsqrt %19 : vector<32x1xf32>
    %21 = vector.broadcast %20 : vector<32x1xf32> to vector<32x128xf32>
    %22 = arith.mulf %17, %21 : vector<32x128xf32>
    %23 = vector.broadcast %3 : vector<1x128xf32> to vector<32x128xf32>
    %24 = arith.mulf %22, %23 : vector<32x128xf32>
    %25 = vector.broadcast %4 : vector<1x128xf32> to vector<32x128xf32>
    %26 = arith.addf %24, %25 : vector<32x128xf32>
    %c0_11 = arith.constant 0 : index
    %c0_12 = arith.constant 0 : index
    %27 = vector.load %arg4[%c0_11, %c0_12] : memref<128x128xf32, #tpu.memory_space<vmem>>, vector<128x128xf32>
    %cst_13 = arith.constant dense<0.000000e+00> : vector<32x128xf32>
    %28 = tpu.matmul %26, %27, %cst_13 {dimension_numbers = #tpu.dot_dimension_numbers<[1], [0], [0], [1], [0, 0, 1, 1], [], []>} : vector<32x128xf32>, vector<128x128xf32>, vector<32x128xf32> -> vector<32x128xf32>
    %c0_14 = arith.constant 0 : index
    %c0_15 = arith.constant 0 : index
    %29 = vector.load %arg5[%c0_14, %c0_15] : memref<1x128xf32, #tpu.memory_space<vmem>>, vector<1x128xf32>
    %30 = vector.broadcast %29 : vector<1x128xf32> to vector<32x128xf32>
    %31 = arith.addf %28, %30 : vector<32x128xf32>
    %c0_16 = arith.constant 0 : index
    %c0_17 = arith.constant 0 : index
    %32 = vector.load %arg6[%c0_16, %c0_17] : memref<128x128xf32, #tpu.memory_space<vmem>>, vector<128x128xf32>
    %cst_18 = arith.constant dense<0.000000e+00> : vector<32x128xf32>
    %33 = tpu.matmul %26, %32, %cst_18 {dimension_numbers = #tpu.dot_dimension_numbers<[1], [0], [0], [1], [0, 0, 1, 1], [], []>} : vector<32x128xf32>, vector<128x128xf32>, vector<32x128xf32> -> vector<32x128xf32>
    %c0_19 = arith.constant 0 : index
    %c0_20 = arith.constant 0 : index
    %34 = vector.load %arg7[%c0_19, %c0_20] : memref<1x128xf32, #tpu.memory_space<vmem>>, vector<1x128xf32>
    %35 = vector.broadcast %34 : vector<1x128xf32> to vector<32x128xf32>
    %36 = arith.addf %33, %35 : vector<32x128xf32>
    %c0_21 = arith.constant 0 : index
    %c0_22 = arith.constant 0 : index
    %37 = vector.load %arg8[%c0_21, %c0_22] : memref<32x128xf32, #tpu.memory_space<vmem>>, vector<32x128xf32>
    tpu.vector_store %arg8[%c0_21, %c0_22], %31 {strides = array<i32>} : memref<32x128xf32, #tpu.memory_space<vmem>>, vector<32x128xf32>,
    %c0_23 = arith.constant 0 : index
    %c0_24 = arith.constant 0 : index
    %38 = vector.load %arg9[%c0_23, %c0_24] : memref<32x128xf32, #tpu.memory_space<vmem>>, vector<32x128xf32>
    tpu.vector_store %arg9[%c0_23, %c0_24], %36 {strides = array<i32>} : memref<32x128xf32, #tpu.memory_space<vmem>>, vector<32x128xf32>,
    return
  }
}

</mosaic_0001>

<llo_original>
// kernel: tpu_custom_call.1
$region0: #{tpu_custom_call.1}
  #allocation0 [shape = 'u32[]', space=smem, size = 0x4, offset = 0x4, fixed_abs, tag = 'smem constant byte address 0x4 - core index']
  #allocation1 [shape = 'u32[144,128]{1,0:T(1,128)}', space=vmem, size = 0x12000, scoped, tag = 'internal scratch']
  %s0 = inlined_call_operand.hbm [shape: f32[32,128], index: 0, kind: input, shape index: {}]
  %s1 = inlined_call_operand.hbm [shape: f32[32,128], index: 1, kind: input, shape index: {}]
  %s2 = inlined_call_operand.vmem [shape: f32[1,128], index: 2, kind: input, shape index: {}]
  %s3 = inlined_call_operand.vmem [shape: f32[1,128], index: 3, kind: input, shape index: {}]
  %s4 = inlined_call_operand.hbm [shape: f32[128,128], index: 4, kind: input, shape index: {}]
  %s5 = inlined_call_operand.vmem [shape: f32[1,128], index: 5, kind: input, shape index: {}]
  %s6 = inlined_call_operand.hbm [shape: f32[128,128], index: 6, kind: input, shape index: {}]
  %s7 = inlined_call_operand.vmem [shape: f32[1,128], index: 7, kind: input, shape index: {}]
  %s8 = inlined_call_operand.hbm [shape: f32[32,128], index: 8, kind: output, shape index: {0}]
  %s9 = inlined_call_operand.hbm [shape: f32[32,128], index: 9, kind: output, shape index: {1}]
  %10 = xla_tuple %s8, %s9
  %s11 = sld [smem:[#allocation0]]
  $region66: #{tpu_custom_call.1} parent=0
    _
  %s13 = ssub.s32 1, %s11
  %s14 = scalar_select 0, %s13, %s11
  $region1: #{tpu_custom_call.1} parent=0
    #allocation2 [shape = 'u8[16384]{0}', space=vmem, size = 0x4000, scoped, tag = 'input window, operand 0, single buffered']
    #allocation3 [shape = 's32[1]{0}', space=sflag, size = 0x4, scoped, tag = 'scoped memory for tpu_custom_call.1']
    #allocation4 [shape = 's32[1]{0}', space=sflag, size = 0x4, scoped, tag = 'scoped memory for tpu_custom_call.1']
    #allocation5 [shape = 'u8[16384]{0}', space=vmem, size = 0x4000, scoped, tag = 'input window, operand 1, single buffered']
    #allocation6 [shape = 's32[1]{0}', space=sflag, size = 0x4, scoped, tag = 'scoped memory for tpu_custom_call.1']
    #allocation7 [shape = 'u8[65536]{0}', space=vmem, size = 0x10000, scoped, tag = 'input window, operand 4, single buffered']
    #allocation8 [shape = 'u8[65536]{0}', space=vmem, size = 0x10000, scoped, tag = 'input window, operand 6, single buffered']
    #allocation9 [shape = 's32[1]{0}', space=sflag, size = 0x4, scoped, tag = 'scoped memory for tpu_custom_call.1']
    #allocation10 [shape = 'u8[16384]{0}', space=vmem, size = 0x4000, scoped, tag = 'output window, operand 0, single buffered']
    #allocation11 [shape = 'u8[16384]{0}', space=vmem, size = 0x4000, scoped, tag = 'output window, operand 1, single buffered']
    #allocation12 [shape = 's32[1]{0}', space=sflag, size = 0x4, scoped, tag = 'scoped memory for tpu_custom_call.1']
    %15 = vsyncpa [#allocation3], 0
    %16 = vsyncpa [#allocation6], 0
    %17 = vsyncpa [#allocation9], 0
    %18 = vsyncpa [#allocation4], 0
    %19 = vsyncpa [#allocation12], 0
    // Predicated region
    $region2: #{tpu_custom_call.1} parent=1 // pred_check
      _
    $region3: #{tpu_custom_call.1} parent=1 // pred_check_branch
      %21 = sbr.rel (0) target = $region5
    $region4: #{tpu_custom_call.1} parent=1 // pred_region
      %s23 = ssub.s32 512, 512
      %24 = vsyncadd [#allocation3], %s23
      %s25 = sshll.u32 [#allocation2], 4
      %s26 = int_to_ptr.vmem [resolvable:$true] %s25
      %31 = dma.hbm_to_vmem [thread:$0]  %s0, 512, %s26, [#allocation3], 128, 128, 8
    $region5: #{tpu_custom_call.1} parent=1 // pred_fallthru
      _
    // Predicated region
    $region6: #{tpu_custom_call.1} parent=1 // pred_check
      _
    $region7: #{tpu_custom_call.1} parent=1 // pred_check_branch
      %33 = sbr.rel (0) target = $region9
    $region8: #{tpu_custom_call.1} parent=1 // pred_region
      %s35 = ssub.s32 512, 512
      %36 = vsyncadd [#allocation6], %s35
      %s37 = sshll.u32 [#allocation5], 4
      %s38 = int_to_ptr.vmem [resolvable:$true] %s37
      %43 = dma.hbm_to_vmem [thread:$0]  %s1, 512, %s38, [#allocation6], 128, 128, 8
    $region9: #{tpu_custom_call.1} parent=1 // pred_fallthru
      _
    // Predicated region
    $region10: #{tpu_custom_call.1} parent=1 // pred_check
      _
    $region11: #{tpu_custom_call.1} parent=1 // pred_check_branch
      %45 = sbr.rel (0) target = $region13
    $region12: #{tpu_custom_call.1} parent=1 // pred_region
      _
    $region13: #{tpu_custom_call.1} parent=1 // pred_fallthru
      _
    // Predicated region
    $region14: #{tpu_custom_call.1} parent=1 // pred_check
      _
    $region15: #{tpu_custom_call.1} parent=1 // pred_check_branch
      %47 = sbr.rel (0) target = $region17
    $region16: #{tpu_custom_call.1} parent=1 // pred_region
      _
    $region17: #{tpu_custom_call.1} parent=1 // pred_fallthru
      _
    // Predicated region
    $region18: #{tpu_custom_call.1} parent=1 // pred_check
      _
    $region19: #{tpu_custom_call.1} parent=1 // pred_check_branch
      %49 = sbr.rel (0) target = $region21
    $region20: #{tpu_custom_call.1} parent=1 // pred_region
      %s51 = ssub.s32 2048, 2048
      %52 = vsyncadd [#allocation6], %s51
      %s53 = sshll.u32 [#allocation7], 4
      %s54 = int_to_ptr.vmem [resolvable:$true] %s53
      %59 = dma.hbm_to_vmem [thread:$0]  %s4, 2048, %s54, [#allocation6], 128, 128, 8
    $region21: #{tpu_custom_call.1} parent=1 // pred_fallthru
      _
    // Predicated region
    $region22: #{tpu_custom_call.1} parent=1 // pred_check
      _
    $region23: #{tpu_custom_call.1} parent=1 // pred_check_branch
      %61 = sbr.rel (0) target = $region25
    $region24: #{tpu_custom_call.1} parent=1 // pred_region
      _
    $region25: #{tpu_custom_call.1} parent=1 // pred_fallthru
      _
    // Predicated region
    $region26: #{tpu_custom_call.1} parent=1 // pred_check
      _
    $region27: #{tpu_custom_call.1} parent=1 // pred_check_branch
      %63 = sbr.rel (0) target = $region29
    $region28: #{tpu_custom_call.1} parent=1 // pred_region
      %s65 = ssub.s32 2048, 2048
      %66 = vsyncadd [#allocation9], %s65
      %s67 = sshll.u32 [#allocation8], 4
      %s68 = int_to_ptr.vmem [resolvable:$true] %s67
      %73 = dma.hbm_to_vmem [thread:$0]  %s6, 2048, %s68, [#allocation9], 128, 128, 8
    $region29: #{tpu_custom_call.1} parent=1 // pred_fallthru
      _
    // Predicated region
    $region30: #{tpu_custom_call.1} parent=1 // pred_check
      _
    $region31: #{tpu_custom_call.1} parent=1 // pred_check_branch
      %75 = sbr.rel (0) target = $region33
    $region32: #{tpu_custom_call.1} parent=1 // pred_region
      _
    $region33: #{tpu_custom_call.1} parent=1 // pred_fallthru
      _
    // Predicated region
    $region34: #{tpu_custom_call.1} parent=1 // pred_check
      _
    $region35: #{tpu_custom_call.1} parent=1 // pred_check_branch
      %77 = sbr.rel (0) target = $region37
    $region36: #{tpu_custom_call.1} parent=1 // pred_region
      %78 = dma.done [#allocation3], 512
    $region37: #{tpu_custom_call.1} parent=1 // pred_fallthru
      _
    // Predicated region
    $region38: #{tpu_custom_call.1} parent=1 // pred_check
      _
    $region39: #{tpu_custom_call.1} parent=1 // pred_check_branch
      %80 = sbr.rel (0) target = $region41
    $region40: #{tpu_custom_call.1} parent=1 // pred_region
      %81 = dma.done [#allocation6], 512
    $region41: #{tpu_custom_call.1} parent=1 // pred_fallthru
      _
    // Predicated region
    $region42: #{tpu_custom_call.1} parent=1 // pred_check
      _
    $region43: #{tpu_custom_call.1} parent=1 // pred_check_branch
      %83 = sbr.rel (0) target = $region45
    $region44: #{tpu_custom_call.1} parent=1 // pred_region
      %84 = dma.done [#allocation6], 2048
    $region45: #{tpu_custom_call.1} parent=1 // pred_fallthru
      _
    // Predicated region
    $region46: #{tpu_custom_call.1} parent=1 // pred_check
      _
    $region47: #{tpu_custom_call.1} parent=1 // pred_check_branch
      %86 = sbr.rel (0) target = $region49
    $region48: #{tpu_custom_call.1} parent=1 // pred_region
      %87 = dma.done [#allocation9], 2048
    $region49: #{tpu_custom_call.1} parent=1 // pred_fallthru
      _
    %v88 = vld [vmem:[#allocation2] sm:$0xff]
    %v89 = vld [vmem:[#allocation2 + $0x8] sm:$0xff]
    %v90 = vld [vmem:[#allocation2 + $0x10] sm:$0xff]
    %v91 = vld [vmem:[#allocation2 + $0x18] sm:$0xff]
    %v92 = vld [vmem:[#allocation5] sm:$0xff]
    %v93 = vld [vmem:[#allocation5 + $0x8] sm:$0xff]
    %v94 = vld [vmem:[#allocation5 + $0x10] sm:$0xff]
    %v95 = vld [vmem:[#allocation5 + $0x18] sm:$0xff]
    %v96 = vadd.f32 %v88, %v92
    %v97 = vadd.f32 %v89, %v93
    %v98 = vadd.f32 %v90, %v94
    %v99 = vadd.f32 %v91, %v95
    %v100 = vld [vmem:[%s2] sm:$0x1]
    %v101 = vld [vmem:[%s3] sm:$0x1]
    %102 = vadd.xlane.f32.xlu0 %v96
    %v103 = vpop.xlane.xlu0 %102
    %104 = vadd.xlane.f32.xlu0 %v97
    %v105 = vpop.xlane.xlu0 %104
    %106 = vadd.xlane.f32.xlu0 %v98
    %v107 = vpop.xlane.xlu0 %106
    %108 = vadd.xlane.f32.xlu0 %v99
    %v109 = vpop.xlane.xlu0 %108
    %v110 = vrcp.pop 128.0
    %v111 = vmul.f32 %v103, %v110
    %v112 = vmul.f32 %v105, %v110
    %v113 = vmul.f32 %v107, %v110
    %v114 = vmul.f32 %v109, %v110
    %v115 = vsub.f32 %v96, %v111
    %v116 = vsub.f32 %v97, %v112
    %v117 = vsub.f32 %v98, %v113
    %v118 = vsub.f32 %v99, %v114
    %v119 = vmul.f32 %v115, %v115
    %v120 = vmul.f32 %v116, %v116
    %v121 = vmul.f32 %v117, %v117
    %v122 = vmul.f32 %v118, %v118
    %123 = vadd.xlane.f32.xlu0 %v119
    %v124 = vpop.xlane.xlu0 %123
    %125 = vadd.xlane.f32.xlu0 %v120
    %v126 = vpop.xlane.xlu0 %125
    %127 = vadd.xlane.f32.xlu0 %v121
    %v128 = vpop.xlane.xlu0 %127
    %129 = vadd.xlane.f32.xlu0 %v122
    %v130 = vpop.xlane.xlu0 %129
    %v131 = vmul.f32 %v124, %v110
    %v132 = vmul.f32 %v126, %v110
    %v133 = vmul.f32 %v128, %v110
    %v134 = vmul.f32 %v130, %v110
    %v135 = vadd.f32 %v131, 1e-12
    %v136 = vadd.f32 %v132, 1e-12
    %v137 = vadd.f32 %v133, 1e-12
    %v138 = vadd.f32 %v134, 1e-12
    %v139 = vrsqrt.pop %v135
    %v140 = vrsqrt.pop %v136
    %v141 = vrsqrt.pop %v137
    %v142 = vrsqrt.pop %v138
    %v143 = vmul.f32 %v115, %v139
    %v144 = vmul.f32 %v116, %v140
    %v145 = vmul.f32 %v117, %v141
    %v146 = vmul.f32 %v118, %v142
    %v148 = vlaneseq
    %v149 = vshrl.u32 %v148, 7
    %v150 = vsub.s32 0, %v149
    %v151 = vrot.slane %v100, %v150
    %v153 = vmul.f32 %v143, %v151
    %v154 = vmul.f32 %v144, %v151
    %v155 = vmul.f32 %v145, %v151
    %v156 = vmul.f32 %v146, %v151
    %v158 = vlaneseq
    %v159 = vshrl.u32 %v158, 7
    %v160 = vsub.s32 0, %v159
    %v161 = vrot.slane %v101, %v160
    %v163 = vadd.f32 %v153, %v161
    %v164 = vadd.f32 %v154, %v161
    %v165 = vadd.f32 %v155, %v161
    %v166 = vadd.f32 %v156, %v161
    %v167 = vld [vmem:[#allocation7] sm:$0xff]
    %v168 = vld [vmem:[#allocation7 + $0x8] sm:$0xff]
    %v169 = vld [vmem:[#allocation7 + $0x10] sm:$0xff]
    %v170 = vld [vmem:[#allocation7 + $0x18] sm:$0xff]
    %v171 = vld [vmem:[#allocation7 + $0x20] sm:$0xff]
    %v172 = vld [vmem:[#allocation7 + $0x28] sm:$0xff]
    %v173 = vld [vmem:[#allocation7 + $0x30] sm:$0xff]
    %v174 = vld [vmem:[#allocation7 + $0x38] sm:$0xff]
    %v175 = vld [vmem:[#allocation7 + $0x40] sm:$0xff]
    %v176 = vld [vmem:[#allocation7 + $0x48] sm:$0xff]
    %v177 = vld [vmem:[#allocation7 + $0x50] sm:$0xff]
    %v178 = vld [vmem:[#allocation7 + $0x58] sm:$0xff]
    %v179 = vld [vmem:[#allocation7 + $0x60] sm:$0xff]
    %v180 = vld [vmem:[#allocation7 + $0x68] sm:$0xff]
    %v181 = vld [vmem:[#allocation7 + $0x70] sm:$0xff]
    %v182 = vld [vmem:[#allocation7 + $0x78] sm:$0xff]
    %v183 = vld [vmem:[%s5] sm:$0x1]
    %v185 = vlaneseq
    %v186 = vshrl.u32 %v185, 7
    %v187 = vsub.s32 0, %v186
    %v188 = vrot.slane %v183, %v187
    %190 = vmatprep.subr.mxu0 0.0
    %191 = vmatpush1.msra.mxu0 %v167
    %192 = vmatprep.subr.mxu0 0.0
    %193 = vmatpush1.msra.mxu0 %v168
    %194 = vmatprep.subr.mxu0 0.0
    %195 = vmatpush1.msra.mxu0 %v169
    %196 = vmatprep.subr.mxu0 0.0
    %197 = vmatpush1.msra.mxu0 %v170
    %198 = vmatprep.subr.mxu0 0.0
    %199 = vmatpush1.msra.mxu0 %v171
    %200 = vmatprep.subr.mxu0 0.0
    %201 = vmatpush1.msra.mxu0 %v172
    %202 = vmatprep.subr.mxu0 0.0
    %203 = vmatpush1.msra.mxu0 %v173
    %204 = vmatprep.subr.mxu0 0.0
    %205 = vmatpush1.msra.mxu0 %v174
    %206 = vmatprep.subr.mxu0 0.0
    %207 = vmatpush1.msra.mxu0 %v175
    %208 = vmatprep.subr.mxu0 0.0
    %209 = vmatpush1.msra.mxu0 %v176
    %210 = vmatprep.subr.mxu0 0.0
    %211 = vmatpush1.msra.mxu0 %v177
    %212 = vmatprep.subr.mxu0 0.0
    %213 = vmatpush1.msra.mxu0 %v178
    %214 = vmatprep.subr.mxu0 0.0
    %215 = vmatpush1.msra.mxu0 %v179
    %216 = vmatprep.subr.mxu0 0.0
    %217 = vmatpush1.msra.mxu0 %v180
    %218 = vmatprep.subr.mxu0 0.0
    %219 = vmatpush1.msra.mxu0 %v181
    %220 = vmatprep.subr.mxu0 0.0
    %221 = vmatpush1.msra.mxu0 %v182
    %222 = vmatprep.subr.mxu0 0.0
    %223 = vmatpush1.msra.mxu0 0.0
    %224 = vmatprep.subr.mxu0 0.0
    %225 = vmatpush1.msra.mxu0 0.0
    %226 = vmatprep.subr.mxu0 0.0
    %227 = vmatpush1.msra.mxu0 0.0
    %228 = vmatprep.subr.mxu0 0.0
    %229 = vmatpush1.msra.mxu0 0.0
    %230 = vmatprep.subr.mxu0 0.0
    %231 = vmatpush1.msra.mxu0 0.0
    %232 = vmatprep.subr.mxu0 0.0
    %233 = vmatpush1.msra.mxu0 0.0
    %234 = vmatprep.subr.mxu0 0.0
    %235 = vmatpush1.msra.mxu0 0.0
    %236 = vmatprep.subr.mxu0 0.0
    %237 = vmatpush1.msra.mxu0 0.0
    %238 = vmatprep.subr.mxu0 0.0
    %239 = vmatpush1.msra.mxu0 0.0
    %240 = vmatprep.subr.mxu0 0.0
    %241 = vmatpush1.msra.mxu0 0.0
    %242 = vmatprep.subr.mxu0 0.0
    %243 = vmatpush1.msra.mxu0 0.0
    %244 = vmatprep.subr.mxu0 0.0
    %245 = vmatpush1.msra.mxu0 0.0
    %246 = vmatprep.subr.mxu0 0.0
    %247 = vmatpush1.msra.mxu0 0.0
    %248 = vmatprep.subr.mxu0 0.0
    %249 = vmatpush1.msra.mxu0 0.0
    %250 = vmatprep.subr.mxu0 0.0
    %251 = vmatpush1.msra.mxu0 0.0
    %252 = vmatprep.subr.mxu0 0.0
    %253 = vmatpush1.msra.mxu0 0.0
    %254 = vmatprep.mubr.f32.mxu0 0.0
    %255 = vmatmul.mubr.f32.gmra.mrb[0].mxu0 %v163
    %v256 = vpop.f32.mrb[0].mxu0
    %v257 = vadd.f32 %v188, %v256
    %v258 = vpop.f32.mrb[0].mxu0
    %259 = vmatprep.mubr.f32.mxu0 0.0
    %260 = vmatmul.mubr.f32.gmra.mrb[0].mxu0 %v164
    %v261 = vpop.f32.mrb[0].mxu0
    %v262 = vadd.f32 %v188, %v261
    %v263 = vpop.f32.mrb[0].mxu0
    %264 = vmatprep.mubr.f32.mxu0 0.0
    %265 = vmatmul.mubr.f32.gmra.mrb[0].mxu0 %v165
    %v266 = vpop.f32.mrb[0].mxu0
    %v267 = vadd.f32 %v188, %v266
    %v268 = vpop.f32.mrb[0].mxu0
    %269 = vmatprep.mubr.f32.mxu0 0.0
    %270 = vmatmul.mubr.f32.gmra.mrb[0].mxu0 %v166
    %v271 = vpop.f32.mrb[0].mxu0
    %v272 = vadd.f32 %v188, %v271
    %v273 = vpop.f32.mrb[0].mxu0
    %274 = vdwg.mxu0
    %v275 = vld [vmem:[#allocation8] sm:$0xff]
    %v276 = vld [vmem:[#allocation8 + $0x8] sm:$0xff]
    %v277 = vld [vmem:[#allocation8 + $0x10] sm:$0xff]
    %v278 = vld [vmem:[#allocation8 + $0x18] sm:$0xff]
    %v279 = vld [vmem:[#allocation8 + $0x20] sm:$0xff]
    %v280 = vld [vmem:[#allocation8 + $0x28] sm:$0xff]
    %v281 = vld [vmem:[#allocation8 + $0x30] sm:$0xff]
    %v282 = vld [vmem:[#allocation8 + $0x38] sm:$0xff]
    %v283 = vld [vmem:[#allocation8 + $0x40] sm:$0xff]
    %v284 = vld [vmem:[#allocation8 + $0x48] sm:$0xff]
    %v285 = vld [vmem:[#allocation8 + $0x50] sm:$0xff]
    %v286 = vld [vmem:[#allocation8 + $0x58] sm:$0xff]
    %v287 = vld [vmem:[#allocation8 + $0x60] sm:$0xff]
    %v288 = vld [vmem:[#allocation8 + $0x68] sm:$0xff]
    %v289 = vld [vmem:[#allocation8 + $0x70] sm:$0xff]
    %v290 = vld [vmem:[#allocation8 + $0x78] sm:$0xff]
    %v291 = vld [vmem:[%s7] sm:$0x1]
    %v293 = vlaneseq
    %v294 = vshrl.u32 %v293, 7
    %v295 = vsub.s32 0, %v294
    %v296 = vrot.slane %v291, %v295
    %298 = vmatprep.subr.mxu0 0.0
    %299 = vmatpush1.msra.mxu0 %v275
    %300 = vmatprep.subr.mxu0 0.0
    %301 = vmatpush1.msra.mxu0 %v276
    %302 = vmatprep.subr.mxu0 0.0
    %303 = vmatpush1.msra.mxu0 %v277
    %304 = vmatprep.subr.mxu0 0.0
    %305 = vmatpush1.msra.mxu0 %v278
    %306 = vmatprep.subr.mxu0 0.0
    %307 = vmatpush1.msra.mxu0 %v279
    %308 = vmatprep.subr.mxu0 0.0
    %309 = vmatpush1.msra.mxu0 %v280
    %310 = vmatprep.subr.mxu0 0.0
    %311 = vmatpush1.msra.mxu0 %v281
    %312 = vmatprep.subr.mxu0 0.0
    %313 = vmatpush1.msra.mxu0 %v282
    %314 = vmatprep.subr.mxu0 0.0
    %315 = vmatpush1.msra.mxu0 %v283
    %316 = vmatprep.subr.mxu0 0.0
    %317 = vmatpush1.msra.mxu0 %v284
    %318 = vmatprep.subr.mxu0 0.0
    %319 = vmatpush1.msra.mxu0 %v285
    %320 = vmatprep.subr.mxu0 0.0
    %321 = vmatpush1.msra.mxu0 %v286
    %322 = vmatprep.subr.mxu0 0.0
    %323 = vmatpush1.msra.mxu0 %v287
    %324 = vmatprep.subr.mxu0 0.0
    %325 = vmatpush1.msra.mxu0 %v288
    %326 = vmatprep.subr.mxu0 0.0
    %327 = vmatpush1.msra.mxu0 %v289
    %328 = vmatprep.subr.mxu0 0.0
    %329 = vmatpush1.msra.mxu0 %v290
    %330 = vmatprep.subr.mxu0 0.0
    %331 = vmatpush1.msra.mxu0 0.0
    %332 = vmatprep.subr.mxu0 0.0
    %333 = vmatpush1.msra.mxu0 0.0
    %334 = vmatprep.subr.mxu0 0.0
    %335 = vmatpush1.msra.mxu0 0.0
    %336 = vmatprep.subr.mxu0 0.0
    %337 = vmatpush1.msra.mxu0 0.0
    %338 = vmatprep.subr.mxu0 0.0
    %339 = vmatpush1.msra.mxu0 0.0
    %340 = vmatprep.subr.mxu0 0.0
    %341 = vmatpush1.msra.mxu0 0.0
    %342 = vmatprep.subr.mxu0 0.0
    %343 = vmatpush1.msra.mxu0 0.0
    %344 = vmatprep.subr.mxu0 0.0
    %345 = vmatpush1.msra.mxu0 0.0
    %346 = vmatprep.subr.mxu0 0.0
    %347 = vmatpush1.msra.mxu0 0.0
    %348 = vmatprep.subr.mxu0 0.0
    %349 = vmatpush1.msra.mxu0 0.0
    %350 = vmatprep.subr.mxu0 0.0
    %351 = vmatpush1.msra.mxu0 0.0
    %352 = vmatprep.subr.mxu0 0.0
    %353 = vmatpush1.msra.mxu0 0.0
    %354 = vmatprep.subr.mxu0 0.0
    %355 = vmatpush1.msra.mxu0 0.0
    %356 = vmatprep.subr.mxu0 0.0
    %357 = vmatpush1.msra.mxu0 0.0
    %358 = vmatprep.subr.mxu0 0.0
    %359 = vmatpush1.msra.mxu0 0.0
    %360 = vmatprep.subr.mxu0 0.0
    %361 = vmatpush1.msra.mxu0 0.0
    %362 = vmatprep.mubr.f32.mxu0 0.0
    %363 = vmatmul.mubr.f32.gmra.mrb[0].mxu0 %v163
    %v364 = vpop.f32.mrb[0].mxu0
    %v365 = vadd.f32 %v296, %v364
    %v366 = vpop.f32.mrb[0].mxu0
    %367 = vmatprep.mubr.f32.mxu0 0.0
    %368 = vmatmul.mubr.f32.gmra.mrb[0].mxu0 %v164
    %v369 = vpop.f32.mrb[0].mxu0
    %v370 = vadd.f32 %v296, %v369
    %v371 = vpop.f32.mrb[0].mxu0
    %372 = vmatprep.mubr.f32.mxu0 0.0
    %373 = vmatmul.mubr.f32.gmra.mrb[0].mxu0 %v165
    %v374 = vpop.f32.mrb[0].mxu0
    %v375 = vadd.f32 %v296, %v374
    %v376 = vpop.f32.mrb[0].mxu0
    %377 = vmatprep.mubr.f32.mxu0 0.0
    %378 = vmatmul.mubr.f32.gmra.mrb[0].mxu0 %v166
    %v379 = vpop.f32.mrb[0].mxu0
    %v380 = vadd.f32 %v296, %v379
    %v381 = vpop.f32.mrb[0].mxu0
    %382 = vdwg.mxu0
    %383 = vst [vmem:[#allocation10] sm:$0xff] %v257
    %384 = vst [vmem:[#allocation10 + $0x8] sm:$0xff] %v262
    %385 = vst [vmem:[#allocation10 + $0x10] sm:$0xff] %v267
    %386 = vst [vmem:[#allocation10 + $0x18] sm:$0xff] %v272
    %387 = vst [vmem:[#allocation11] sm:$0xff] %v365
    %388 = vst [vmem:[#allocation11 + $0x8] sm:$0xff] %v370
    %389 = vst [vmem:[#allocation11 + $0x10] sm:$0xff] %v375
    %390 = vst [vmem:[#allocation11 + $0x18] sm:$0xff] %v380
    // Predicated region
    $region50: #{tpu_custom_call.1} parent=1 // pred_check
      _
    $region51: #{tpu_custom_call.1} parent=1 // pred_check_branch
      %392 = sbr.rel (0) target = $region53
    $region52: #{tpu_custom_call.1} parent=1 // pred_region
      %s394 = ssub.s32 512, 512
      %395 = vsyncadd [#allocation4], %s394
      %s396 = sshll.u32 [#allocation10], 4
      %s397 = int_to_ptr.vmem [resolvable:$true] %s396
      %402 = dma.vmem_to_hbm [thread:$0]  %s397, 512, %s8, [#allocation4], 128, 128, 8
    $region53: #{tpu_custom_call.1} parent=1 // pred_fallthru
      _
    // Predicated region
    $region54: #{tpu_custom_call.1} parent=1 // pred_check
      _
    $region55: #{tpu_custom_call.1} parent=1 // pred_check_branch
      %404 = sbr.rel (0) target = $region57
    $region56: #{tpu_custom_call.1} parent=1 // pred_region
      %s406 = ssub.s32 512, 512
      %407 = vsyncadd [#allocation12], %s406
      %s408 = sshll.u32 [#allocation11], 4
      %s409 = int_to_ptr.vmem [resolvable:$true] %s408
      %414 = dma.vmem_to_hbm [thread:$0]  %s409, 512, %s9, [#allocation12], 128, 128, 8
    $region57: #{tpu_custom_call.1} parent=1 // pred_fallthru
      _
    // Predicated region
    $region58: #{tpu_custom_call.1} parent=1 // pred_check
      _
    $region59: #{tpu_custom_call.1} parent=1 // pred_check_branch
      %416 = sbr.rel (0) target = $region61
    $region60: #{tpu_custom_call.1} parent=1 // pred_region
      %417 = dma.done [#allocation4], 512
    $region61: #{tpu_custom_call.1} parent=1 // pred_fallthru
      _
    // Predicated region
    $region62: #{tpu_custom_call.1} parent=1 // pred_check
      _
    $region63: #{tpu_custom_call.1} parent=1 // pred_check_branch
      %419 = sbr.rel (0) target = $region65
    $region64: #{tpu_custom_call.1} parent=1 // pred_region
      %420 = dma.done [#allocation12], 512
    $region65: #{tpu_custom_call.1} parent=1 // pred_fallthru
      _
    %421 = vsyncpa [#allocation3], 1
    %422 = vsyncpa [#allocation6], 1
    %423 = vsyncpa [#allocation9], 1
    %424 = vsyncpa [#allocation4], 1
    %425 = vsyncpa [#allocation12], 1

</llo_original>
